<compile_context>
chip_gen: v6e
topology: v6e:2x2x1
jax: 0.10.0
libtpu: 0.0.40
codegen_flags: <defaults>
</compile_context>

<pallas_src>
import jax
import jax.numpy as jnp
from jax.experimental import pallas as pl
from jax.experimental.pallas import tpu as pltpu


# ----------------------------------------------------------------------------
# Kernel: per-row affine, y = x * scale_row + shift_row
# ----------------------------------------------------------------------------
def _affine_rows_kernel(x_ref, scale_ref, shift_ref, y_ref):
    # x_ref: (tR, tT); scale_ref / shift_ref: (tR, 1) broadcast along lanes.
    y_ref[...] = x_ref[...] * scale_ref[...] + shift_ref[...]


def _round_up(n, m):
    return ((n + m - 1) // m) * m


def _round_down_pos(n, m):
    return max(m, (n // m) * m)


def _vmem_limit_bytes():
    # Pick the scoped-VMEM limit per generation instead of hard-coding 32 MiB.
    try:
        cap = pltpu.get_tpu_info().vmem_capacity_bytes
    except Exception:
        cap = 128 * 1024 * 1024
    return int(min(96 * 1024 * 1024, (cap * 3) // 4))


def _choose_tiles(R, T, itemsize, vmem_limit):
    """Pick (tR, tT): lane-dense tiles, multiples of (8, 128), ~8 MiB each."""
    R_full = _round_up(R, 8)
    T_full = _round_up(T, 128)
    # ~4 tiles live at once (double-buffered input + output); leave headroom.
    target = min(8 * 1024 * 1024, vmem_limit // 6)

    tT = min(T_full, 2048)
    tR = min(R_full, _round_down_pos(target // (tT * itemsize), 8))
    if tR == R_full:
        # Rows exhausted: spend the remaining budget on wider lane tiles.
        tT = min(T_full, max(tT, _round_down_pos(target // (tR * itemsize), 128)))

    # Keep >= 2 grid steps along a parallel axis when the data allows it
    # (v7x has 2 TensorCores sharing the grid; harmless on v5e/v6e).
    if pl.cdiv(R, tR) * pl.cdiv(T, tT) == 1:
        if T_full >= 256:
            tT = _round_up(pl.cdiv(T, 2), 128)
        elif R_full >= 16:
            tR = _round_up(pl.cdiv(R, 2), 8)
    return tR, tT


def _apply_channel_affine(x, scale_c, shift_c):
    """y[b, c, t] = x[b, c, t] * scale_c[c] + shift_c[c] via a tiled Pallas FMA."""
    B, C, T = x.shape
    dtype = x.dtype
    itemsize = jnp.dtype(dtype).itemsize
    R = B * C

    # Lane-dense 2D layout: rows = (b, c) pairs on sublanes, time on lanes.
    x2 = x.reshape(R, T)
    scale_r = jnp.broadcast_to(
        jnp.asarray(scale_c).astype(dtype).reshape(1, C, 1), (B, C, 1)
    ).reshape(R, 1)
    shift_r = jnp.broadcast_to(
        jnp.asarray(shift_c).astype(dtype).reshape(1, C, 1), (B, C, 1)
    ).reshape(R, 1)

    vmem_limit = _vmem_limit_bytes()
    tR, tT = _choose_tiles(R, T, itemsize, vmem_limit)
    grid = (pl.cdiv(R, tR), pl.cdiv(T, tT))

    cost = pl.CostEstimate(
        flops=2 * R * T,
        transcendentals=0,
        bytes_accessed=2 * R * T * itemsize + 2 * R * itemsize,
    )

    y2 = pl.pallas_call(
        _affine_rows_kernel,
        out_shape=jax.ShapeDtypeStruct((R, T), dtype),
        grid=grid,
        in_specs=[
            pl.BlockSpec((tR, tT), lambda i, j: (i, j)),
            pl.BlockSpec((tR, 1), lambda i, j: (i, 0)),  # params resident per row-tile
            pl.BlockSpec((tR, 1), lambda i, j: (i, 0)),
        ],
        out_specs=pl.BlockSpec((tR, tT), lambda i, j: (i, j)),
        compiler_params=pltpu.CompilerParams(
            dimension_semantics=("parallel", "parallel"),  # v7x: shard across both TCs
            vmem_limit_bytes=vmem_limit,
        ),
        cost_estimate=cost,
    )(x2, scale_r, shift_r)

    return y2.reshape(B, C, T)


# ----------------------------------------------------------------------------
# ActNorm module (forward semantics of the PyTorch reference)
# ----------------------------------------------------------------------------
def actnorm_forward_apply(x, loc, scale):
    # y = scale * (x + loc) = x * scale + (scale * loc)
    scale_c = scale.reshape(-1)
    shift_c = (scale * loc).reshape(-1)
    return _apply_channel_affine(x, scale_c, shift_c)


class ActNorm:
    """JAX/Pallas port of the PyTorch ActNorm module (forward + reverse)."""

    def __init__(self, in_channel, logdet=True, pretrained=False):
        self.loc = jnp.zeros((1, in_channel, 1), jnp.float32)
        self.scale = jnp.ones((1, in_channel, 1), jnp.float32)
        self.initialized = pretrained
        self.logdet = logdet

    def initialize(self, x):
        # One-time data-dependent init: per-channel mean over (batch, time) and
        # unbiased std (ddof=1), matching torch.std. Plain JAX/XLA — not the
        # hot path. NOTE: mutates Python state, so run the first call outside
        # jax.jit (or handle init functionally) in jitted training loops.
        xf = x.astype(jnp.float32)
        mean = jnp.mean(xf, axis=(0, 2), keepdims=True)          # (1, C, 1)
        std = jnp.std(xf, axis=(0, 2), keepdims=True, ddof=1)    # (1, C, 1)
        self.loc = -mean
        self.scale = 1.0 / (std + 1e-6)

    def __call__(self, x):
        if not self.initialized:
            self.initialize(x)
            self.initialized = True
        y = actnorm_forward_apply(x, self.loc, self.scale)
        if self.logdet:
            # Matches the PyTorch reference: torch.mean(log|scale|).
            logdet = jnp.mean(jnp.log(jnp.abs(self.scale)))
            return y, logdet
        return y

    def reverse(self, output):
        # output / scale - loc  ==  output * (1/scale) + (-loc): reuse the
        # same Pallas FMA kernel with inverted parameters.
        inv_scale_c = (1.0 / self.scale).reshape(-1)
        neg_loc_c = (-self.loc).reshape(-1)
        return _apply_channel_affine(output, inv_scale_c, neg_loc_c)


# ----------------------------------------------------------------------------
# Self-test against a pure-JAX reference
# ----------------------------------------------------------------------------
if __name__ == "__main__":
    # T deliberately not a multiple of 128 to exercise ragged (masked) edge tiles.
    B, C, T = 2, 4, 1000
    key = jax.random.PRNGKey(0)
    x = jax.random.normal(key, (B, C, T), dtype=jnp.float32) * 2.5 + 0.7

    model = ActNorm(in_channel=C, logdet=True)

    # first call: data-dependent init, then Pallas apply
    y1, logdet1 = model(x)
    jax.block_until_ready((y1, logdet1))

    # second call: already-initialized path (stored loc / scale)
    y2, logdet2 = model(x)
    jax.block_until_ready((y2, logdet2))

    # pure-JAX reference
    mean = jnp.mean(x, axis=(0, 2), keepdims=True)
    std = jnp.std(x, axis=(0, 2), keepdims=True, ddof=1)
    scale_ref = 1.0 / (std + 1e-6)
    y_ref = scale_ref * (x - mean)
    logdet_ref = jnp.mean(jnp.log(jnp.abs(scale_ref)))

    assert jnp.allclose(y1, y_ref, atol=1e-4, rtol=1e-4), "init-path y mismatch"
    assert jnp.allclose(y2, y_ref, atol=1e-4, rtol=1e-4), "apply-path y mismatch"
    assert jnp.allclose(logdet1, logdet_ref, atol=1e-5, rtol=1e-5), "init-path logdet mismatch"
    assert jnp.allclose(logdet2, logdet_ref, atol=1e-5, rtol=1e-5), "apply-path logdet mismatch"

    # reverse round-trip through the same kernel
    x_back = model.reverse(y2)
    jax.block_until_ready(x_back)
    assert jnp.allclose(x_back, x, atol=1e-3, rtol=1e-3), "reverse round-trip mismatch"

    print("KERNEL_OK")
</pallas_src>

<mosaic_0001>
module attributes {stable_mosaic.version = 11 : i64} {
  func.func @_affine_rows_kernel(%arg0: i32, %arg1: i32, %arg2: memref<8x512xf32, #tpu.memory_space<vmem>>, %arg3: memref<8x1xf32, #tpu.memory_space<vmem>>, %arg4: memref<8x1xf32, #tpu.memory_space<vmem>>, %arg5: memref<8x512xf32, #tpu.memory_space<vmem>>) attributes {dimension_semantics = [#tpu.dimension_semantics<parallel>, #tpu.dimension_semantics<parallel>], iteration_bounds = array<i64: 1, 2>, scalar_prefetch = 0 : i64, scratch_operands = 0 : i64, tpu.core_type = #tpu.core_type<tc>, window_params = [{transform_indices = @transform_0, window_bounds = array<i64: 8, 512>}, {transform_indices = @transform_1, window_bounds = array<i64: 8, 1>}, {transform_indices = @transform_2, window_bounds = array<i64: 8, 1>}, {transform_indices = @transform_3, window_bounds = array<i64: 8, 512>}]} {
    %c0 = arith.constant 0 : index
    %c0_0 = arith.constant 0 : index
    %0 = vector.load %arg2[%c0, %c0_0] : memref<8x512xf32, #tpu.memory_space<vmem>>, vector<8x512xf32>
    %c0_1 = arith.constant 0 : index
    %c0_2 = arith.constant 0 : index
    %1 = vector.load %arg3[%c0_1, %c0_2] : memref<8x1xf32, #tpu.memory_space<vmem>>, vector<8x1xf32>
    %2 = vector.broadcast %1 : vector<8x1xf32> to vector<8x512xf32>
    %3 = arith.mulf %0, %2 : vector<8x512xf32>
    %c0_3 = arith.constant 0 : index
    %c0_4 = arith.constant 0 : index
    %4 = vector.load %arg4[%c0_3, %c0_4] : memref<8x1xf32, #tpu.memory_space<vmem>>, vector<8x1xf32>
    %5 = vector.broadcast %4 : vector<8x1xf32> to vector<8x512xf32>
    %6 = arith.addf %3, %5 : vector<8x512xf32>
    %c0_5 = arith.constant 0 : index
    %c0_6 = arith.constant 0 : index
    %7 = vector.load %arg5[%c0_5, %c0_6] : memref<8x512xf32, #tpu.memory_space<vmem>>, vector<8x512xf32>
    tpu.vector_store %arg5[%c0_5, %c0_6], %6 {strides = array<i32>} : memref<8x512xf32, #tpu.memory_space<vmem>>, vector<8x512xf32>,
    return
  }
  func.func @transform_0(%arg0: i32, %arg1: i32) -> (i32, i32) {
    %c0_i32 = arith.constant 0 : i32
    return %arg0, %arg1 : i32, i32
  }
  func.func @transform_1(%arg0: i32, %arg1: i32) -> (i32, i32) {
    %c0_i32 = arith.constant 0 : i32
    %c0_i32_0 = arith.constant 0 : i32
    return %arg0, %c0_i32 : i32, i32
  }
  func.func @transform_2(%arg0: i32, %arg1: i32) -> (i32, i32) {
    %c0_i32 = arith.constant 0 : i32
    %c0_i32_0 = arith.constant 0 : i32
    return %arg0, %c0_i32 : i32, i32
  }
  func.func @transform_3(%arg0: i32, %arg1: i32) -> (i32, i32) {
    %c0_i32 = arith.constant 0 : i32
    return %arg0, %arg1 : i32, i32
  }
}

</mosaic_0001>

<llo_original>
// kernel: tpu_custom_call.1
$region0: #{tpu_custom_call.1}
  #allocation0 [shape = 'u32[]', space=smem, size = 0x4, offset = 0x4, fixed_abs, tag = 'smem constant byte address 0x4 - core index']
  #allocation1 [shape = 'u32[144,128]{1,0:T(1,128)}', space=vmem, size = 0x12000, scoped, tag = 'internal scratch']
  %s0 = inlined_call_operand.hbm [shape: f32[8,1000], index: 0, kind: input, shape index: {}]
  %s1 = inlined_call_operand.vmem [shape: f32[8,1], index: 1, kind: input, shape index: {}]
  %s2 = inlined_call_operand.vmem [shape: f32[8,1], index: 2, kind: input, shape index: {}]
  %s3 = inlined_call_operand.hbm [shape: f32[8,1000], index: 3, kind: output, shape index: {}]
  %s4 = sld [smem:[#allocation0]]
  $region49: #{tpu_custom_call.1} parent=0
    _
  %s6 = ssub.s32 1, %s4
  %s7 = scalar_select 0, %s6, %s4
  $region1: #{tpu_custom_call.1} parent=0
    #allocation2 [shape = 'u8[32768]{0}', space=vmem, size = 0x8000, scoped, tag = 'input window, operand 0']
    #allocation3 [shape = 's32[2]{0}', space=sflag, size = 0x8, scoped, tag = 'scoped memory for tpu_custom_call.1']
    #allocation4 [shape = 's32[2]{0}', space=sflag, size = 0x8, scoped, tag = 'scoped memory for tpu_custom_call.1']
    #allocation5 [shape = 'u8[32768]{0}', space=vmem, size = 0x8000, scoped, tag = 'output window, operand 0']
    %8 = vsyncpa [#allocation3], 0
    %s9 = scalar_lea.sflag [#allocation3], 1
    %10 = vsyncpa %s9, 0
    %11 = vsyncpa [#allocation4], 0
    %s12 = scalar_lea.sflag [#allocation4], 1
    %13 = vsyncpa %s12, 0
    loop: start=0, step=1, limit=4
    $region2: #{tpu_custom_call.1} parent=1 // loop_pre_header
      _
    $region3: #{tpu_custom_call.1} parent=1 // loop_header
      %s15 = sphi 0, %s19
      %p16 = scmp.ge.s32.totalorder %s15, 4
      %s22 = sphi 0, %s34
      %s23 = sphi 0, %s30
      %s24 = sphi 0, %s22
      %s25 = sphi 0, %s23
      %s26 = sphi 0, %s24
      %s27 = sphi 0, %s25
      %s39 = sphi 0, %s41
      %s42 = sphi 0, %s39
      %s43 = sphi 0, %s42
      %s59 = sphi 0, %s43
      %s65 = sphi 0, %s67
      %s68 = sphi 0, %s65
      %s69 = sphi 0, %s68
      %s85 = sphi 0, %s69
      %s91 = sphi 0, %s93
      %s94 = sphi 0, %s91
      %s95 = sphi 0, %s94
      %s111 = sphi 0, %s95
      %s119 = sphi 0, %s121
      %s122 = sphi 0, %s119
      %s123 = sphi 0, %s122
      %s139 = sphi 0, %s123
    $region4: #{tpu_custom_call.1} parent=1 // loop_header_branch
      %18 = sbr.rel (%p16) target = $region8
    $region5: #{tpu_custom_call.1} parent=1 // loop_body
      %s20 = ssub.s32 %s15, 1
      %s21 = ssub.s32 %s15, 2
      %s28 = sadd.s32 1, %s23
      %p29 = scmp.ge.s32.totalorder %s28, 2
      %s30 = scalar_select %p29, 0, %s28
      %s31 = sadd.s32 1, %s22
      %s32 = scalar_select %p29, %s31, %s22
      %p33 = scmp.ge.s32.totalorder %s32, 1
      %s34 = scalar_select %p33, 0, %s32
      %s35 = ssub.s32 %s22, %s34
      %s36 = ssub.s32 %s23, %s30
      %s37 = sor.u32 %s35, %s36
      %p38 = scmp.eq.s32.totalorder %s37, 0
      %s40 = sadd.s32 %s39, 1
      %s41 = scalar_select %p38, %s39, %s40
      %p44 = pneg %p38
      %p45 = scmp.eq.s32.totalorder %s15, 1
      %p46 = por %p44, %p45
      %p47 = scmp.ne.s32.totalorder %s39, %s42
      %p48 = scmp.eq.s32.totalorder %s15, 0
      %p49 = por %p47, %p48
      %p50 = scmp.ne.s32.totalorder %s39, %s42
      %p51 = scmp.eq.s32.totalorder %s20, 1
      %p52 = por %p50, %p51
      %p53 = scmp.ne.s32.totalorder %s42, %s43
      %p54 = scmp.eq.s32.totalorder %s20, 0
      %p55 = por %p53, %p54
      %p56 = scmp.ne.s32.totalorder %s42, %s43
      %p57 = scmp.eq.s32.totalorder %s21, 1
      %p58 = por %p56, %p57
      %p60 = scmp.ne.s32.totalorder %s43, %s59
      %p61 = scmp.eq.s32.totalorder %s21, 0
      %p62 = por %p60, %p61
      %s63 = ssub.s32 %s22, %s34
      %p64 = scmp.eq.s32.totalorder %s63, 0
      %s66 = sadd.s32 %s65, 1
      %s67 = scalar_select %p64, %s65, %s66
      %p70 = pneg %p64
      %p71 = scmp.eq.s32.totalorder %s15, 1
      %p72 = por %p70, %p71
      %p73 = scmp.ne.s32.totalorder %s65, %s68
      %p74 = scmp.eq.s32.totalorder %s15, 0
      %p75 = por %p73, %p74
      %p76 = scmp.ne.s32.totalorder %s65, %s68
      %p77 = scmp.eq.s32.totalorder %s20, 1
      %p78 = por %p76, %p77
      %p79 = scmp.ne.s32.totalorder %s68, %s69
      %p80 = scmp.eq.s32.totalorder %s20, 0
      %p81 = por %p79, %p80
      %p82 = scmp.ne.s32.totalorder %s68, %s69
      %p83 = scmp.eq.s32.totalorder %s21, 1
      %p84 = por %p82, %p83
      %p86 = scmp.ne.s32.totalorder %s69, %s85
      %p87 = scmp.eq.s32.totalorder %s21, 0
      %p88 = por %p86, %p87
      %s89 = ssub.s32 %s22, %s34
      %p90 = scmp.eq.s32.totalorder %s89, 0
      %s92 = sadd.s32 %s91, 1
      %s93 = scalar_select %p90, %s91, %s92
      %p96 = pneg %p90
      %p97 = scmp.eq.s32.totalorder %s15, 1
      %p98 = por %p96, %p97
      %p99 = scmp.ne.s32.totalorder %s91, %s94
      %p100 = scmp.eq.s32.totalorder %s15, 0
      %p101 = por %p99, %p100
      %p102 = scmp.ne.s32.totalorder %s91, %s94
      %p103 = scmp.eq.s32.totalorder %s20, 1
      %p104 = por %p102, %p103
      %p105 = scmp.ne.s32.totalorder %s94, %s95
      %p106 = scmp.eq.s32.totalorder %s20, 0
      %p107 = por %p105, %p106
      %p108 = scmp.ne.s32.totalorder %s94, %s95
      %p109 = scmp.eq.s32.totalorder %s21, 1
      %p110 = por %p108, %p109
      %p112 = scmp.ne.s32.totalorder %s95, %s111
      %p113 = scmp.eq.s32.totalorder %s21, 0
      %p114 = por %p112, %p113
      %s115 = ssub.s32 %s22, %s34
      %s116 = ssub.s32 %s23, %s30
      %s117 = sor.u32 %s115, %s116
      %p118 = scmp.eq.s32.totalorder %s117, 0
      %s120 = sadd.s32 %s119, 1
      %s121 = scalar_select %p118, %s119, %s120
      %p124 = pneg %p118
      %p125 = scmp.eq.s32.totalorder %s15, 1
      %p126 = por %p124, %p125
      %p127 = scmp.ne.s32.totalorder %s119, %s122
      %p128 = scmp.eq.s32.totalorder %s15, 0
      %p129 = por %p127, %p128
      %p130 = scmp.ne.s32.totalorder %s119, %s122
      %p131 = scmp.eq.s32.totalorder %s20, 1
      %p132 = por %p130, %p131
      %p133 = scmp.ne.s32.totalorder %s122, %s123
      %p134 = scmp.eq.s32.totalorder %s20, 0
      %p135 = por %p133, %p134
      %p136 = scmp.ne.s32.totalorder %s122, %s123
      %p137 = scmp.eq.s32.totalorder %s21, 1
      %p138 = por %p136, %p137
      %p140 = scmp.ne.s32.totalorder %s123, %s139
      %p141 = scmp.eq.s32.totalorder %s21, 0
      %p142 = por %p140, %p141
      %p143 = scmp.le.s32.totalorder 1, %s15
      %p144 = scmp.lt.s32.totalorder %s15, 3
      %p145 = pnand %p143, %p144
      %p146 = pneg %p145
      // Predicated region
      $region9: #{tpu_custom_call.1} parent=5 // pred_check
        _
      $region10: #{tpu_custom_call.1} parent=5 // pred_check_branch
        %148 = sbr.rel (%p145) target = $region12
      $region11: #{tpu_custom_call.1} parent=5 // pred_region
        %s149 = ssub.s32 %s15, 1
        // Predicated region
        $region13: #{tpu_custom_call.1} parent=11 // pred_check
          %p150 = pneg %p81
        $region14: #{tpu_custom_call.1} parent=11 // pred_check_branch
          %152 = sbr.rel (%p150) target = $region16
        $region15: #{tpu_custom_call.1} parent=11 // pred_region
          %p153 = scmp.lt.s32.totalorder %s24, 0
          %s154 = scalar_select %p153, %s24, 0
          %s155 = smul.addr %s154, 8
          %s156 = scalar_lea.vmem %s1, %s155
        $region16: #{tpu_custom_call.1} parent=11 // pred_fallthru
          _
        // Predicated region
        $region17: #{tpu_custom_call.1} parent=11 // pred_check
          %p157 = pneg %p107
        $region18: #{tpu_custom_call.1} parent=11 // pred_check_branch
          %159 = sbr.rel (%p157) target = $region20
        $region19: #{tpu_custom_call.1} parent=11 // pred_region
          %p160 = scmp.lt.s32.totalorder %s24, 0
          %s161 = scalar_select %p160, %s24, 0
          %s162 = smul.addr %s161, 8
          %s163 = scalar_lea.vmem %s2, %s162
        $region20: #{tpu_custom_call.1} parent=11 // pred_fallthru
          _
      $region12: #{tpu_custom_call.1} parent=5 // pred_fallthru
        _
      %p164 = scmp.lt.s32.totalorder %s15, 2
      // Predicated region
      $region21: #{tpu_custom_call.1} parent=5 // pred_check
        %p165 = pneg %p164
      $region22: #{tpu_custom_call.1} parent=5 // pred_check_branch
        %167 = sbr.rel (%p165) target = $region24
      $region23: #{tpu_custom_call.1} parent=5 // pred_region
        // Predicated region
        $region25: #{tpu_custom_call.1} parent=23 // pred_check
          %p168 = pneg %p49
        $region26: #{tpu_custom_call.1} parent=23 // pred_check_branch
          %170 = sbr.rel (%p168) target = $region28
        $region27: #{tpu_custom_call.1} parent=23 // pred_region
          %s171 = sand.u32 %s39, 1
          %s172 = scalar_lea.sflag [#allocation3], %s171
          %s173 = sand.u32 %s39, 1
          %s174 = smul.addr %s173, 32
          %s175 = scalar_lea.vmem [#allocation2], %s174
          %s176 = smul.u32 4, %s23
          %s178 = ssub.s32 512, 512
          %179 = vsyncadd %s172, %s178
          %s180 = smul.addr %s22, 8
          %s181 = sadd.s32 %s176, %s180
          %s182 = smul.addr %s181, 128
          %s183 = scalar_lea.hbm %s0, %s182
          %s185 = sshll.u32 %s175, 4
          %s186 = int_to_ptr.vmem [resolvable:$true] %s185
          %188 = dma.hbm_to_vmem [thread:$0]  %s183, 512, %s186, %s172
        $region28: #{tpu_custom_call.1} parent=23 // pred_fallthru
          _
      $region24: #{tpu_custom_call.1} parent=5 // pred_fallthru
        _
      %p189 = scmp.le.s32.totalorder 1, %s15
      %p190 = scmp.lt.s32.totalorder %s15, 3
      %p191 = pnand %p189, %p190
      %p192 = pneg %p191
      // Predicated region
      $region29: #{tpu_custom_call.1} parent=5 // pred_check
        _
      $region30: #{tpu_custom_call.1} parent=5 // pred_check_branch
        %194 = sbr.rel (%p191) target = $region32
      $region31: #{tpu_custom_call.1} parent=5 // pred_region
        %s195 = ssub.s32 %s15, 1
        %s196 = sand.u32 %s42, 1
        %s197 = scalar_lea.sflag [#allocation3], %s196
        %s198 = sand.u32 %s42, 1
        %s199 = smul.addr %s198, 32
        %s200 = scalar_lea.vmem [#allocation2], %s199
        // Predicated region
        $region33: #{tpu_custom_call.1} parent=31 // pred_check
          %p201 = pneg %p55
        $region34: #{tpu_custom_call.1} parent=31 // pred_check_branch
          %203 = sbr.rel (%p201) target = $region36
        $region35: #{tpu_custom_call.1} parent=31 // pred_region
          %204 = dma.done %s197, 512
        $region36: #{tpu_custom_call.1} parent=31 // pred_fallthru
          _
        %s205 = sand.u32 %s42, 1
        %s206 = scalar_lea.sflag [#allocation3], %s205
        %s207 = sand.u32 %s42, 1
        %s208 = smul.addr %s207, 32
        %s209 = scalar_lea.vmem [#allocation2], %s208
        %p210 = pneg %p55
        %p211 = pneg %p52
        %p212 = scmp.lt.s32.totalorder %s24, 0
        %s213 = scalar_select %p212, %s24, 0
        %s214 = smul.addr %s213, 8
        %s215 = scalar_lea.vmem %s1, %s214
        %p216 = pneg %p81
        %p217 = pneg %p78
        %p218 = scmp.lt.s32.totalorder %s24, 0
        %s219 = scalar_select %p218, %s24, 0
        %s220 = smul.addr %s219, 8
        %s221 = scalar_lea.vmem %s2, %s220
        %p222 = pneg %p107
        %p223 = pneg %p104
        %p224 = pneg %p135
        %p225 = pneg %p132
        %s226 = sand.u32 %s122, 1
        %s227 = scalar_lea.sflag [#allocation4], %s226
        %s228 = sand.u32 %s122, 1
        %s229 = smul.addr %s228, 32
        %s230 = scalar_lea.vmem [#allocation5], %s229
        %s231 = smul.u32 4, %s25
        %p232 = scmp.lt.s32.totalorder %s24, 0
        %s233 = scalar_select %p232, %s24, 0
        %s234 = smul.addr %s233, 8
        %s235 = scalar_lea.vmem %s1, %s234
        %p236 = scmp.lt.s32.totalorder %s24, 0
        %s237 = scalar_select %p236, %s24, 0
        %s238 = smul.addr %s237, 8
        %s239 = scalar_lea.vmem %s2, %s238
        %s240 = smul.u32 4, %s25
        %v241 = vld [vmem:[%s200] sm:$0xff]
        %v242 = vld [vmem:[%s200 + $0x8] sm:$0xff]
        %v243 = vld [vmem:[%s200 + $0x10] sm:$0xff]
        %v244 = vld [vmem:[%s200 + $0x18] sm:$0xff]
        %v245 = vld [vmem:[%s235] sm:$0xff]
        %247 = vset.pattern.permute.xlu0 0
        %248 = vperm.xlu0 %247, %v245
        %v249 = vpop.permute.xlu0 %248
        %v251 = vmul.f32 %v241, %v249
        %v252 = vmul.f32 %v242, %v249
        %v253 = vmul.f32 %v243, %v249
        %v254 = vmul.f32 %v244, %v249
        %v255 = vld [vmem:[%s239] sm:$0xff]
        %257 = vset.pattern.permute.xlu0 0
        %258 = vperm.xlu0 %257, %v255
        %v259 = vpop.permute.xlu0 %258
        %v261 = vadd.f32 %v251, %v259
        %v262 = vadd.f32 %v252, %v259
        %v263 = vadd.f32 %v253, %v259
        %v264 = vadd.f32 %v254, %v259
        %265 = vst [vmem:[%s230] sm:$0xff] %v261
        %266 = vst [vmem:[%s230 + $0x8] sm:$0xff] %v262
        %267 = vst [vmem:[%s230 + $0x10] sm:$0xff] %v263
        %268 = vst [vmem:[%s230 + $0x18] sm:$0xff] %v264
        %s269 = sand.u32 %s122, 1
        %s270 = scalar_lea.sflag [#allocation4], %s269
        %s271 = sand.u32 %s122, 1
        %s272 = smul.addr %s271, 32
        %s273 = scalar_lea.vmem [#allocation5], %s272
        // Predicated region
        $region37: #{tpu_custom_call.1} parent=31 // pred_check
          %p274 = pneg %p132
        $region38: #{tpu_custom_call.1} parent=31 // pred_check_branch
          %276 = sbr.rel (%p274) target = $region40
        $region39: #{tpu_custom_call.1} parent=31 // pred_region
          %s277 = smul.u32 4, %s25
          %s279 = ssub.s32 512, 512
          %280 = vsyncadd %s270, %s279
          %s281 = smul.addr %s24, 8
          %s282 = sadd.s32 %s277, %s281
          %s283 = smul.addr %s282, 128
          %s284 = scalar_lea.hbm %s3, %s283
          %s286 = sshll.u32 %s273, 4
          %s287 = int_to_ptr.vmem [resolvable:$true] %s286
          %289 = dma.vmem_to_hbm [thread:$0]  %s287, 512, %s284, %s270
        $region40: #{tpu_custom_call.1} parent=31 // pred_fallthru
          _
      $region32: #{tpu_custom_call.1} parent=5 // pred_fallthru
        _
      %p290 = scmp.le.s32.totalorder 2, %s15
      // Predicated region
      $region41: #{tpu_custom_call.1} parent=5 // pred_check
        %p291 = pneg %p290
      $region42: #{tpu_custom_call.1} parent=5 // pred_check_branch
        %293 = sbr.rel (%p291) target = $region44
      $region43: #{tpu_custom_call.1} parent=5 // pred_region
        %s294 = ssub.s32 %s15, 2
        // Predicated region
        $region45: #{tpu_custom_call.1} parent=43 // pred_check
          %p295 = pneg %p138
        $region46: #{tpu_custom_call.1} parent=43 // pred_check_branch
          %297 = sbr.rel (%p295) target = $region48
        $region47: #{tpu_custom_call.1} parent=43 // pred_region
          %s298 = sand.u32 %s123, 1
          %s299 = scalar_lea.sflag [#allocation4], %s298
          %s300 = sand.u32 %s123, 1
          %s301 = smul.addr %s300, 32
          %s302 = scalar_lea.vmem [#allocation5], %s301
          %303 = dma.done %s299, 512
        $region48: #{tpu_custom_call.1} parent=43 // pred_fallthru
          _
      $region44: #{tpu_custom_call.1} parent=5 // pred_fallthru
        _
    $region6: #{tpu_custom_call.1} parent=1 // loop_footer
      %s19 = sadd.s32 1, %s15
    $region7: #{tpu_custom_call.1} parent=1 // loop_footer_branch
      %14 = sbr.rel target = $region3
    $region8: #{tpu_custom_call.1} parent=1 // loop_exit
      _
    %304 = vsyncpa [#allocation3], 1
    %s305 = scalar_lea.sflag [#allocation3], 1
    %306 = vsyncpa %s305, 1
    %307 = vsyncpa [#allocation4], 1
    %s308 = scalar_lea.sflag [#allocation4], 1
    %309 = vsyncpa %s308, 1

</llo_original>
